<compile_context>
chip_gen: v7x
topology: tpu7x:2x2x1
jax: 0.10.0
libtpu: 0.0.40
codegen_flags: <defaults>
</compile_context>

<pallas_src>
import functools

import jax
import jax.numpy as jnp
from jax import lax
from jax.experimental import pallas as pl
from jax.experimental.pallas import tpu as pltpu


def _cdiv(a, b):
    return -(-a // b)


def _round_up(x, m):
    return _cdiv(x, m) * m


def _channel_dec_kernel(x_ref, w1_ref, b1_ref, w2_ref, b2_ref, w3_ref, b3_ref,
                        gamma_ref, beta_ref, o_ref, pack_scratch_ref=None, *,
                        size1, pack, eps):
    f32 = jnp.float32
    w1 = w1_ref[...]
    x = x_ref[...].astype(w1.dtype)        # x arrives in its HBM dtype; cast once in VMEM
    tile = x.shape[0]
    feat = w1.shape[1]                     # padded feature width (multiple of 128)

    b1 = b1_ref[...]
    w2 = w2_ref[...]
    b2 = b2_ref[...]
    w3 = w3_ref[...]
    b3 = b3_ref[...]
    gamma = gamma_ref[...]
    beta = beta_ref[...]

    # layer: Linear(size2 -> size1) + ReLU            (MXU, f32 accumulation)
    x1 = jnp.maximum(jnp.dot(x, w1, preferred_element_type=f32) + b1, 0.0)
    # layer2: Linear(size1 -> 512) + ReLU + Linear(512 -> size1)
    h = jnp.maximum(jnp.dot(x1.astype(w2.dtype), w2, preferred_element_type=f32) + b2, 0.0)
    x2 = jnp.dot(h.astype(w3.dtype), w3, preferred_element_type=f32) + b3

    # residual + LayerNorm over the true size1 features (biased variance, eps inside
    # rsqrt, statistics in f32).  Columns >= size1 are wrapper zero padding: they are
    # kept out of the statistics and must end up *exactly* zero in `out` (b1/b3/gamma/
    # beta are zero-padded and `cent` is masked) -- the packing below relies on this.
    y = x1 + x2                                             # (tile, feat) f32
    inv_n = 1.0 / size1
    mean = jnp.sum(y, axis=-1, keepdims=True) * inv_n
    cent = y - mean
    if feat != size1:
        col = lax.broadcasted_iota(jnp.int32, (tile, feat), 1)
        cent = jnp.where(col < size1, cent, 0.0)
    var = jnp.sum(cent * cent, axis=-1, keepdims=True) * inv_n
    out = cent * lax.rsqrt(var + eps) * gamma + beta        # padded cols stay exactly 0

    if pack == 1:
        # Feature dim already lane-dense (multiple of 128): store directly.
        o_ref[...] = out.astype(o_ref.dtype)
        return

    # Lane-dense output packing (size1 | 128): `pack` consecutive tokens share one
    # 128-lane output row; the packed slab is row-major identical to (N, size1).
    # Stage `out` in VMEM scratch, read every pack-th row with a strided sublane slice,
    # rotate the valid size1 lanes into place on the XLU (padded lanes are exactly zero,
    # so the wrapped-around zeros are harmless) and accumulate.  No extra MXU work and
    # no per-step iota/compare churn; the final store is an unmasked full-lane vst.
    rows_d = tile // pack
    pack_scratch_ref[...] = out
    dense = pack_scratch_ref[pl.ds(0, rows_d, stride=pack), :]
    for j in range(1, pack):
        zj = pack_scratch_ref[pl.ds(j, rows_d, stride=pack), :]
        dense = dense + pltpu.roll(zj, shift=j * size1, axis=1)
    o_ref[...] = dense.astype(o_ref.dtype)


def channel_dec_forward(receives, params, *, tile_rows=2048, eps=1e-5,
                        use_bf16=True, vmem_limit_bytes=48 * 1024 * 1024):
    """receives: (B, S, size2) -> (B, S, size1) float32.

    Defaults target v7x (64 MiB VMEM): tile_rows=2048, vmem_limit_bytes=48 MiB.
    On v5e/v6e (128 MiB VMEM) sweep tile_rows up to 4096-8192 with ~96 MiB.
    use_bf16 stores W1/W2/W3 (and the in-kernel x tile) in bf16 for the native bf16
    MXU; matmuls accumulate in f32 and LayerNorm statistics stay in f32.
    """
    B, S, size2 = receives.shape
    w1, b1, w2, b2, w3, b3, gamma, beta = params
    size1 = w1.shape[1]
    hidden = w2.shape[1]
    N = B * S

    # Lane-dense layout: either pack 128//size1 tokens per 128-lane output row (when
    # size1 divides 128), or pad the feature axis up to a multiple of 128 and slice
    # the padding off in the wrapper.
    if size1 < 128 and 128 % size1 == 0:
        pack, feat = 128 // size1, 128
    else:
        pack, feat = 1, _round_up(size1, 128)
    assert feat % 128 == 0 and (pack == 1 or pack * size1 == 128)

    # Row-tile selection: large tiles amortize the ~0.35us per-grid-step overhead;
    # for very large N keep >= ~4 grid steps so v7x megacore can shard the "parallel"
    # axis and the IO pipeline has depth (v5e/v6e only need pipeline depth).
    align = max(16, 8 * pack)
    if N <= align:
        tile = align
    else:
        steps = _cdiv(N, tile_rows)
        if N > tile_rows:
            steps = max(steps, 4)
        tile = min(_round_up(_cdiv(N, steps), align), _round_up(N, align))
    Np = _round_up(N, tile)
    grid = (Np // tile,)

    # ---- one-time wrapper-side layout plumbing (params only; x is not re-cast) ------
    x2d = receives.reshape(N, size2)
    if Np != N:
        x2d = jnp.pad(x2d, ((0, Np - N), (0, 0)))

    def pad_cols(a):
        return a if a.shape[-1] == feat else jnp.pad(a, ((0, 0), (0, feat - a.shape[-1])))

    w1p, b1p = pad_cols(w1), pad_cols(b1)                 # (size2, feat), (1, feat)
    w2p = w2 if feat == size1 else jnp.pad(w2, ((0, feat - size1), (0, 0)))
    w3p, b3p = pad_cols(w3), pad_cols(b3)                 # (hidden, feat), (1, feat)
    gp, bp = pad_cols(gamma), pad_cols(beta)              # zero padding keeps out's padded lanes 0

    wdt = jnp.bfloat16 if use_bf16 else jnp.float32
    w1p, w2p, w3p = w1p.astype(wdt), w2p.astype(wdt), w3p.astype(wdt)

    if pack > 1:
        out_rows, out_cols, out_block = Np // pack, 128, (tile // pack, 128)
        scratch_shapes = [pltpu.VMEM((tile, feat), jnp.float32)]
    else:
        out_rows, out_cols, out_block = Np, feat, (tile, feat)
        scratch_shapes = []

    # Advisory cost estimate for the XLA scheduler.
    flops = 2 * Np * (size2 * feat + feat * hidden + hidden * feat)
    bytes_accessed = (x2d.size * x2d.dtype.itemsize + out_rows * out_cols * 4
                      + sum(int(a.size) * a.dtype.itemsize
                            for a in (w1p, b1p, w2p, b2, w3p, b3p, gp, bp)))
    cost = pl.CostEstimate(flops=int(flops), transcendentals=int(Np),
                           bytes_accessed=int(bytes_accessed))

    kernel = functools.partial(_channel_dec_kernel, size1=size1, pack=pack, eps=eps)
    # Whole-array VMEM residents: fetched once, no double buffering.
    resident = pl.BlockSpec(memory_space=pltpu.MemorySpace.VMEM)

    out = pl.pallas_call(
        kernel,
        out_shape=jax.ShapeDtypeStruct((out_rows, out_cols), jnp.float32),
        grid_spec=pltpu.PrefetchScalarGridSpec(
            num_scalar_prefetch=0,
            grid=grid,
            in_specs=[
                pl.BlockSpec((tile, size2), lambda i: (i, 0)),   # token tile (pipelined)
                resident, resident,                              # W1, b1
                resident, resident,                              # W2, b2
                resident, resident,                              # W3, b3
                resident, resident,                              # gamma, beta
            ],
            out_specs=pl.BlockSpec(out_block, lambda i: (i, 0)),
            scratch_shapes=scratch_shapes,
        ),
        compiler_params=pltpu.CompilerParams(
            dimension_semantics=("parallel",),
            vmem_limit_bytes=vmem_limit_bytes),
        cost_estimate=cost,
    )(x2d, w1p, b1p, w2p, b2, w3p, b3p, gp, bp)

    if pack > 1:
        out2d = out.reshape(Np, size1)[:N]      # free: row-major identical layout
    else:
        out2d = out[:N, :size1]
    return out2d.reshape(B, S, size1)


def init_params(key, size1, size2, hidden=512):
    """Deterministic synthetic parameters (PyTorch-Linear-style uniform init)."""
    ks = jax.random.split(key, 6)

    def linear_init(kw, kb, fan_in, fan_out):
        bound = 1.0 / jnp.sqrt(fan_in)
        w = jax.random.uniform(kw, (fan_in, fan_out), jnp.float32, -bound, bound)
        b = jax.random.uniform(kb, (1, fan_out), jnp.float32, -bound, bound)
        return w, b

    w1, b1 = linear_init(ks[0], ks[1], size2, size1)   # Linear(size2 -> size1)
    w2, b2 = linear_init(ks[2], ks[3], size1, hidden)  # Linear(size1 -> 512)
    w3, b3 = linear_init(ks[4], ks[5], hidden, size1)  # Linear(512 -> size1)
    gamma = jnp.ones((1, size1), jnp.float32)          # LayerNorm weight
    beta = jnp.zeros((1, size1), jnp.float32)          # LayerNorm bias
    return (w1, b1, w2, b2, w3, b3, gamma, beta)


def channel_dec_ref(receives, params, eps=1e-5):
    """Pure-JAX reference for correctness checking."""
    B, S, _ = receives.shape
    w1, b1, w2, b2, w3, b3, gamma, beta = params
    x = receives.reshape(B * S, -1)
    x1 = jnp.maximum(x @ w1 + b1, 0.0)
    x2 = jnp.maximum(x1 @ w2 + b2, 0.0) @ w3 + b3
    y = x1 + x2
    mean = jnp.mean(y, axis=-1, keepdims=True)
    var = jnp.mean((y - mean) ** 2, axis=-1, keepdims=True)
    out = (y - mean) / jnp.sqrt(var + eps) * gamma + beta
    return out.reshape(B, S, -1)


if __name__ == "__main__":
    # Small shapes: batch=2, seq=8, size2=16 (channel symbols), size1=32 (model dim)
    B, S = 2, 8
    size1, size2 = 32, 16

    key = jax.random.PRNGKey(0)
    k_x, k_p = jax.random.split(key)
    x = jax.random.normal(k_x, (B, S, size2), jnp.float32)
    params = init_params(k_p, size1, size2)

    ref = channel_dec_ref(x, params)

    # Default path: bf16 operands (native bf16 MXU on v5e/v6e/v7x), f32 accumulation
    # and f32 LayerNorm -> loose tolerance.
    out = jax.block_until_ready(channel_dec_forward(x, params))
    assert out.shape == (B, S, size1), out.shape
    assert jnp.allclose(out, ref, atol=1e-1, rtol=1e-1), "bf16 kernel mismatch vs reference"

    # f32-operand path (tight tolerance) to verify numerics exactly.
    out_f32 = jax.block_until_ready(channel_dec_forward(x, params, use_bf16=False))
    assert jnp.allclose(out_f32, ref, atol=1e-4, rtol=1e-4), "f32 kernel mismatch vs reference"

    print("KERNEL_OK")
</pallas_src>

<mosaic_0001>
module attributes {stable_mosaic.version = 11 : i64} {
  func.func @_channel_dec_kernel(%arg0: i32, %arg1: memref<32x16xf32, #tpu.memory_space<vmem>>, %arg2: memref<16x128xbf16, #tpu.memory_space<vmem>>, %arg3: memref<1x128xf32, #tpu.memory_space<vmem>>, %arg4: memref<128x512xbf16, #tpu.memory_space<vmem>>, %arg5: memref<1x512xf32, #tpu.memory_space<vmem>>, %arg6: memref<512x128xbf16, #tpu.memory_space<vmem>>, %arg7: memref<1x128xf32, #tpu.memory_space<vmem>>, %arg8: memref<1x128xf32, #tpu.memory_space<vmem>>, %arg9: memref<1x128xf32, #tpu.memory_space<vmem>>, %arg10: memref<8x128xf32, #tpu.memory_space<vmem>>, %arg11: memref<32x128xf32, #tpu.memory_space<vmem>>) attributes {dimension_semantics = [#tpu.dimension_semantics<parallel>], iteration_bounds = array<i64: 1>, scalar_prefetch = 0 : i64, scratch_operands = 1 : i64, tpu.core_type = #tpu.core_type<tc>, window_params = [{transform_indices = @transform_0, window_bounds = array<i64: 32, 16>}, {pipeline_mode = #tpu.pipeline_mode<synchronous>, transform_indices = @transform_1, window_bounds = array<i64: 16, 128>}, {pipeline_mode = #tpu.pipeline_mode<synchronous>, transform_indices = @transform_2, window_bounds = array<i64: 1, 128>}, {pipeline_mode = #tpu.pipeline_mode<synchronous>, transform_indices = @transform_3, window_bounds = array<i64: 128, 512>}, {pipeline_mode = #tpu.pipeline_mode<synchronous>, transform_indices = @transform_4, window_bounds = array<i64: 1, 512>}, {pipeline_mode = #tpu.pipeline_mode<synchronous>, transform_indices = @transform_5, window_bounds = array<i64: 512, 128>}, {pipeline_mode = #tpu.pipeline_mode<synchronous>, transform_indices = @transform_6, window_bounds = array<i64: 1, 128>}, {pipeline_mode = #tpu.pipeline_mode<synchronous>, transform_indices = @transform_7, window_bounds = array<i64: 1, 128>}, {pipeline_mode = #tpu.pipeline_mode<synchronous>, transform_indices = @transform_8, window_bounds = array<i64: 1, 128>}, {transform_indices = @transform_9, window_bounds = array<i64: 8, 128>}]} {
    %c0 = arith.constant 0 : index
    %c0_0 = arith.constant 0 : index
    %0 = vector.load %arg2[%c0, %c0_0] : memref<16x128xbf16, #tpu.memory_space<vmem>>, vector<16x128xbf16>
    %c0_1 = arith.constant 0 : index
    %c0_2 = arith.constant 0 : index
    %1 = vector.load %arg1[%c0_1, %c0_2] : memref<32x16xf32, #tpu.memory_space<vmem>>, vector<32x16xf32>
    %2 = arith.truncf %1 : vector<32x16xf32> to vector<32x16xbf16>
    %c0_3 = arith.constant 0 : index
    %c0_4 = arith.constant 0 : index
    %3 = vector.load %arg3[%c0_3, %c0_4] : memref<1x128xf32, #tpu.memory_space<vmem>>, vector<1x128xf32>
    %c0_5 = arith.constant 0 : index
    %c0_6 = arith.constant 0 : index
    %4 = vector.load %arg4[%c0_5, %c0_6] : memref<128x512xbf16, #tpu.memory_space<vmem>>, vector<128x512xbf16>
    %c0_7 = arith.constant 0 : index
    %c0_8 = arith.constant 0 : index
    %5 = vector.load %arg5[%c0_7, %c0_8] : memref<1x512xf32, #tpu.memory_space<vmem>>, vector<1x512xf32>
    %c0_9 = arith.constant 0 : index
    %c0_10 = arith.constant 0 : index
    %6 = vector.load %arg6[%c0_9, %c0_10] : memref<512x128xbf16, #tpu.memory_space<vmem>>, vector<512x128xbf16>
    %c0_11 = arith.constant 0 : index
    %c0_12 = arith.constant 0 : index
    %7 = vector.load %arg7[%c0_11, %c0_12] : memref<1x128xf32, #tpu.memory_space<vmem>>, vector<1x128xf32>
    %c0_13 = arith.constant 0 : index
    %c0_14 = arith.constant 0 : index
    %8 = vector.load %arg8[%c0_13, %c0_14] : memref<1x128xf32, #tpu.memory_space<vmem>>, vector<1x128xf32>
    %c0_15 = arith.constant 0 : index
    %c0_16 = arith.constant 0 : index
    %9 = vector.load %arg9[%c0_15, %c0_16] : memref<1x128xf32, #tpu.memory_space<vmem>>, vector<1x128xf32>
    %cst = arith.constant dense<0.000000e+00> : vector<32x128xf32>
    %10 = tpu.matmul %2, %0, %cst {dimension_numbers = #tpu.dot_dimension_numbers<[1], [0], [0], [1], [0, 0, 1, 1], [], []>} : vector<32x16xbf16>, vector<16x128xbf16>, vector<32x128xf32> -> vector<32x128xf32>
    %11 = vector.broadcast %3 : vector<1x128xf32> to vector<32x128xf32>
    %12 = arith.addf %10, %11 : vector<32x128xf32>
    %cst_17 = arith.constant 0.000000e+00 : f32
    %13 = vector.broadcast %cst_17 : f32 to vector<32x128xf32>
    %14 = arith.maximumf %12, %13 : vector<32x128xf32>
    %15 = arith.truncf %14 : vector<32x128xf32> to vector<32x128xbf16>
    %cst_18 = arith.constant dense<0.000000e+00> : vector<32x512xf32>
    %16 = tpu.matmul %15, %4, %cst_18 {dimension_numbers = #tpu.dot_dimension_numbers<[1], [0], [0], [1], [0, 0, 1, 1], [], []>} : vector<32x128xbf16>, vector<128x512xbf16>, vector<32x512xf32> -> vector<32x512xf32>
    %17 = vector.broadcast %5 : vector<1x512xf32> to vector<32x512xf32>
    %18 = arith.addf %16, %17 : vector<32x512xf32>
    %cst_19 = arith.constant 0.000000e+00 : f32
    %19 = vector.broadcast %cst_19 : f32 to vector<32x512xf32>
    %20 = arith.maximumf %18, %19 : vector<32x512xf32>
    %21 = arith.truncf %20 : vector<32x512xf32> to vector<32x512xbf16>
    %cst_20 = arith.constant dense<0.000000e+00> : vector<32x128xf32>
    %22 = tpu.matmul %21, %6, %cst_20 {dimension_numbers = #tpu.dot_dimension_numbers<[1], [0], [0], [1], [0, 0, 1, 1], [], []>} : vector<32x512xbf16>, vector<512x128xbf16>, vector<32x128xf32> -> vector<32x128xf32>
    %23 = vector.broadcast %7 : vector<1x128xf32> to vector<32x128xf32>
    %24 = arith.addf %22, %23 : vector<32x128xf32>
    %25 = arith.addf %14, %24 : vector<32x128xf32>
    %cst_21 = arith.constant dense<0.000000e+00> : vector<32xf32>
    %26 = vector.multi_reduction <add>, %25, %cst_21 [1] : vector<32x128xf32> to vector<32xf32>
    %27 = vector.shape_cast %26 : vector<32xf32> to vector<32x1xf32>
    %cst_22 = arith.constant 3.125000e-02 : f32
    %28 = vector.broadcast %cst_22 : f32 to vector<32x1xf32>
    %29 = arith.mulf %27, %28 : vector<32x1xf32>
    %30 = vector.broadcast %29 : vector<32x1xf32> to vector<32x128xf32>
    %31 = arith.subf %25, %30 : vector<32x128xf32>
    %32 = tpu.iota {dimensions = array<i32: 1>} : vector<32x128xi32>
    %c32_i32 = arith.constant 32 : i32
    %33 = vector.broadcast %c32_i32 : i32 to vector<32x128xi32>
    %34 = arith.cmpi slt, %32, %33 : vector<32x128xi32>
    %cst_23 = arith.constant 0.000000e+00 : f32
    %35 = vector.broadcast %cst_23 : f32 to vector<32x128xf32>
    %36 = arith.select %34, %31, %35 : vector<32x128xi1>, vector<32x128xf32>
    %37 = arith.mulf %36, %36 : vector<32x128xf32>
    %cst_24 = arith.constant dense<0.000000e+00> : vector<32xf32>
    %38 = vector.multi_reduction <add>, %37, %cst_24 [1] : vector<32x128xf32> to vector<32xf32>
    %39 = vector.shape_cast %38 : vector<32xf32> to vector<32x1xf32>
    %cst_25 = arith.constant 3.125000e-02 : f32
    %40 = vector.broadcast %cst_25 : f32 to vector<32x1xf32>
    %41 = arith.mulf %39, %40 : vector<32x1xf32>
    %cst_26 = arith.constant 9.99999974E-6 : f32
    %42 = vector.broadcast %cst_26 : f32 to vector<32x1xf32>
    %43 = arith.addf %41, %42 : vector<32x1xf32>
    %44 = math.rsqrt %43 : vector<32x1xf32>
    %45 = vector.broadcast %44 : vector<32x1xf32> to vector<32x128xf32>
    %46 = arith.mulf %36, %45 : vector<32x128xf32>
    %47 = vector.broadcast %8 : vector<1x128xf32> to vector<32x128xf32>
    %48 = arith.mulf %46, %47 : vector<32x128xf32>
    %49 = vector.broadcast %9 : vector<1x128xf32> to vector<32x128xf32>
    %50 = arith.addf %48, %49 : vector<32x128xf32>
    %c0_27 = arith.constant 0 : index
    %c0_28 = arith.constant 0 : index
    %51 = vector.load %arg11[%c0_27, %c0_28] : memref<32x128xf32, #tpu.memory_space<vmem>>, vector<32x128xf32>
    tpu.vector_store %arg11[%c0_27, %c0_28], %50 {strides = array<i32>} : memref<32x128xf32, #tpu.memory_space<vmem>>, vector<32x128xf32>,
    %c0_29 = arith.constant 0 : index
    %c0_30 = arith.constant 0 : index
    %52 = tpu.strided_load %arg11[%c0_29, %c0_30] {strides = array<i32: 4, 1>} : memref<32x128xf32, #tpu.memory_space<vmem>>, vector<8x128xf32>
    %c1 = arith.constant 1 : index
    %c0_31 = arith.constant 0 : index
    %53 = tpu.strided_load %arg11[%c1, %c0_31] {strides = array<i32: 4, 1>} : memref<32x128xf32, #tpu.memory_space<vmem>>, vector<8x128xf32>
    %c32_i32_32 = arith.constant 32 : i32
    %54 = tpu.dynamic_rotate %53 by %c32_i32_32 dim 1 : vector<8x128xf32>, i32 -> vector<8x128xf32>
    %55 = arith.addf %52, %54 : vector<8x128xf32>
    %c2 = arith.constant 2 : index
    %c0_33 = arith.constant 0 : index
    %56 = tpu.strided_load %arg11[%c2, %c0_33] {strides = array<i32: 4, 1>} : memref<32x128xf32, #tpu.memory_space<vmem>>, vector<8x128xf32>
    %c64_i32 = arith.constant 64 : i32
    %57 = tpu.dynamic_rotate %56 by %c64_i32 dim 1 : vector<8x128xf32>, i32 -> vector<8x128xf32>
    %58 = arith.addf %55, %57 : vector<8x128xf32>
    %c3 = arith.constant 3 : index
    %c0_34 = arith.constant 0 : index
    %59 = tpu.strided_load %arg11[%c3, %c0_34] {strides = array<i32: 4, 1>} : memref<32x128xf32, #tpu.memory_space<vmem>>, vector<8x128xf32>
    %c96_i32 = arith.constant 96 : i32
    %60 = tpu.dynamic_rotate %59 by %c96_i32 dim 1 : vector<8x128xf32>, i32 -> vector<8x128xf32>
    %61 = arith.addf %58, %60 : vector<8x128xf32>
    %c0_35 = arith.constant 0 : index
    %c0_36 = arith.constant 0 : index
    %62 = vector.load %arg10[%c0_35, %c0_36] : memref<8x128xf32, #tpu.memory_space<vmem>>, vector<8x128xf32>
    tpu.vector_store %arg10[%c0_35, %c0_36], %61 {strides = array<i32>} : memref<8x128xf32, #tpu.memory_space<vmem>>, vector<8x128xf32>,
    return
  }
  func.func @transform_0(%arg0: i32) -> (i32, i32) {
    %c0_i32 = arith.constant 0 : i32
    %c0_i32_0 = arith.constant 0 : i32
    return %arg0, %c0_i32 : i32, i32
  }
  func.func @transform_1(%arg0: i32) -> (i32, i32) {
    %c0_i32 = arith.constant 0 : i32
    %c0_i32_0 = arith.constant 0 : i32
    %c0_i32_1 = arith.constant 0 : i32
    return %c0_i32, %c0_i32_0 : i32, i32
  }
  func.func @transform_2(%arg0: i32) -> (i32, i32) {
    %c0_i32 = arith.constant 0 : i32
    %c0_i32_0 = arith.constant 0 : i32
    %c0_i32_1 = arith.constant 0 : i32
    return %c0_i32, %c0_i32_0 : i32, i32
  }
  func.func @transform_3(%arg0: i32) -> (i32, i32) {
    %c0_i32 = arith.constant 0 : i32
    %c0_i32_0 = arith.constant 0 : i32
    %c0_i32_1 = arith.constant 0 : i32
    return %c0_i32, %c0_i32_0 : i32, i32
  }
  func.func @transform_4(%arg0: i32) -> (i32, i32) {
    %c0_i32 = arith.constant 0 : i32
    %c0_i32_0 = arith.constant 0 : i32
    %c0_i32_1 = arith.constant 0 : i32
    return %c0_i32, %c0_i32_0 : i32, i32
  }
  func.func @transform_5(%arg0: i32) -> (i32, i32) {
    %c0_i32 = arith.constant 0 : i32
    %c0_i32_0 = arith.constant 0 : i32
    %c0_i32_1 = arith.constant 0 : i32
    return %c0_i32, %c0_i32_0 : i32, i32
  }
  func.func @transform_6(%arg0: i32) -> (i32, i32) {
    %c0_i32 = arith.constant 0 : i32
    %c0_i32_0 = arith.constant 0 : i32
    %c0_i32_1 = arith.constant 0 : i32
    return %c0_i32, %c0_i32_0 : i32, i32
  }
  func.func @transform_7(%arg0: i32) -> (i32, i32) {
    %c0_i32 = arith.constant 0 : i32
    %c0_i32_0 = arith.constant 0 : i32
    %c0_i32_1 = arith.constant 0 : i32
    return %c0_i32, %c0_i32_0 : i32, i32
  }
  func.func @transform_8(%arg0: i32) -> (i32, i32) {
    %c0_i32 = arith.constant 0 : i32
    %c0_i32_0 = arith.constant 0 : i32
    %c0_i32_1 = arith.constant 0 : i32
    return %c0_i32, %c0_i32_0 : i32, i32
  }
  func.func @transform_9(%arg0: i32) -> (i32, i32) {
    %c0_i32 = arith.constant 0 : i32
    %c0_i32_0 = arith.constant 0 : i32
    return %arg0, %c0_i32 : i32, i32
  }
}

</mosaic_0001>

<llo_original>
// kernel: tpu_custom_call.1
$region0: #{tpu_custom_call.1}
  #allocation0 [shape = 'u32[]', space=smem, size = 0x4, offset = 0x4, fixed_abs, tag = 'smem constant byte address 0x4 - core index']
  #allocation1 [shape = 'u32[144,128]{1,0:T(1,128)}', space=vmem, size = 0x12000, scoped, tag = 'internal scratch']
  #allocation2 [shape = 'f32[32,128]{1,0:T(8,128)}', space=vmem, size = 0x4000, scoped, tag = 'scratch operand']
  %s0 = inlined_call_operand.vmem [shape: f32[32,16], index: 0, kind: input, shape index: {}]
  %s1 = inlined_call_operand.vmem [shape: bf16[16,128], index: 1, kind: input, shape index: {}]
  %s2 = inlined_call_operand.vmem [shape: f32[1,128], index: 2, kind: input, shape index: {}]
  %s3 = inlined_call_operand.hbm [shape: bf16[128,512], index: 3, kind: input, shape index: {}]
  %s4 = inlined_call_operand.vmem [shape: f32[1,512], index: 4, kind: input, shape index: {}]
  %s5 = inlined_call_operand.hbm [shape: bf16[512,128], index: 5, kind: input, shape index: {}]
  %s6 = inlined_call_operand.vmem [shape: f32[1,128], index: 6, kind: input, shape index: {}]
  %s7 = inlined_call_operand.vmem [shape: f32[1,128], index: 7, kind: input, shape index: {}]
  %s8 = inlined_call_operand.vmem [shape: f32[1,128], index: 8, kind: input, shape index: {}]
  %s9 = inlined_call_operand.hbm [shape: f32[8,128], index: 9, kind: output, shape index: {}]
  %s10 = sld [smem:[#allocation0]]
  $region54: #{tpu_custom_call.1} parent=0
    _
  %s12 = ssub.s32 1, %s10
  %s13 = scalar_select 0, %s12, %s10
  $region1: #{tpu_custom_call.1} parent=0
    #allocation3 [shape = 'u8[131072]{0}', space=vmem, size = 0x20000, scoped, tag = 'input window, operand 3, single buffered']
    #allocation4 [shape = 's32[1]{0}', space=sflag, size = 0x4, scoped, tag = 'scoped memory for tpu_custom_call.1']
    #allocation5 [shape = 's32[1]{0}', space=sflag, size = 0x4, scoped, tag = 'scoped memory for tpu_custom_call.1']
    #allocation6 [shape = 'u8[131072]{0}', space=vmem, size = 0x20000, scoped, tag = 'input window, operand 5, single buffered']
    #allocation7 [shape = 's32[1]{0}', space=sflag, size = 0x4, scoped, tag = 'scoped memory for tpu_custom_call.1']
    #allocation8 [shape = 'u8[4096]{0}', space=vmem, size = 0x1000, scoped, tag = 'output window, operand 0, single buffered']
    %14 = vsyncpa [#allocation4], 0
    %15 = vsyncpa [#allocation7], 0
    %16 = vsyncpa [#allocation5], 0
    // Predicated region
    $region2: #{tpu_custom_call.1} parent=1 // pred_check
      _
    $region3: #{tpu_custom_call.1} parent=1 // pred_check_branch
      %18 = sbr.rel (0) target = $region5
    $region4: #{tpu_custom_call.1} parent=1 // pred_region
      _
    $region5: #{tpu_custom_call.1} parent=1 // pred_fallthru
      _
    // Predicated region
    $region6: #{tpu_custom_call.1} parent=1 // pred_check
      _
    $region7: #{tpu_custom_call.1} parent=1 // pred_check_branch
      %20 = sbr.rel (0) target = $region9
    $region8: #{tpu_custom_call.1} parent=1 // pred_region
      _
    $region9: #{tpu_custom_call.1} parent=1 // pred_fallthru
      _
    // Predicated region
    $region10: #{tpu_custom_call.1} parent=1 // pred_check
      _
    $region11: #{tpu_custom_call.1} parent=1 // pred_check_branch
      %22 = sbr.rel (0) target = $region13
    $region12: #{tpu_custom_call.1} parent=1 // pred_region
      _
    $region13: #{tpu_custom_call.1} parent=1 // pred_fallthru
      _
    // Predicated region
    $region14: #{tpu_custom_call.1} parent=1 // pred_check
      _
    $region15: #{tpu_custom_call.1} parent=1 // pred_check_branch
      %24 = sbr.rel (0) target = $region17
    $region16: #{tpu_custom_call.1} parent=1 // pred_region
      %s26 = ssub.s32 4096, 4096
      %27 = vsyncadd [#allocation4], %s26
      %s28 = sshll.u32 [#allocation3], 4
      %s29 = int_to_ptr.vmem [resolvable:$true] %s28
      %34 = dma.hbm_to_vmem [thread:$0]  %s3, 4096, %s29, [#allocation4], 256, 256, 16
    $region17: #{tpu_custom_call.1} parent=1 // pred_fallthru
      _
    // Predicated region
    $region18: #{tpu_custom_call.1} parent=1 // pred_check
      _
    $region19: #{tpu_custom_call.1} parent=1 // pred_check_branch
      %36 = sbr.rel (0) target = $region21
    $region20: #{tpu_custom_call.1} parent=1 // pred_region
      _
    $region21: #{tpu_custom_call.1} parent=1 // pred_fallthru
      _
    // Predicated region
    $region22: #{tpu_custom_call.1} parent=1 // pred_check
      _
    $region23: #{tpu_custom_call.1} parent=1 // pred_check_branch
      %38 = sbr.rel (0) target = $region25
    $region24: #{tpu_custom_call.1} parent=1 // pred_region
      %s40 = ssub.s32 4096, 4096
      %41 = vsyncadd [#allocation7], %s40
      %s42 = sshll.u32 [#allocation6], 4
      %s43 = int_to_ptr.vmem [resolvable:$true] %s42
      %48 = dma.hbm_to_vmem [thread:$0]  %s5, 4096, %s43, [#allocation7], 64, 64, 4
    $region25: #{tpu_custom_call.1} parent=1 // pred_fallthru
      _
    // Predicated region
    $region26: #{tpu_custom_call.1} parent=1 // pred_check
      _
    $region27: #{tpu_custom_call.1} parent=1 // pred_check_branch
      %50 = sbr.rel (0) target = $region29
    $region28: #{tpu_custom_call.1} parent=1 // pred_region
      _
    $region29: #{tpu_custom_call.1} parent=1 // pred_fallthru
      _
    // Predicated region
    $region30: #{tpu_custom_call.1} parent=1 // pred_check
      _
    $region31: #{tpu_custom_call.1} parent=1 // pred_check_branch
      %52 = sbr.rel (0) target = $region33
    $region32: #{tpu_custom_call.1} parent=1 // pred_region
      _
    $region33: #{tpu_custom_call.1} parent=1 // pred_fallthru
      _
    // Predicated region
    $region34: #{tpu_custom_call.1} parent=1 // pred_check
      _
    $region35: #{tpu_custom_call.1} parent=1 // pred_check_branch
      %54 = sbr.rel (0) target = $region37
    $region36: #{tpu_custom_call.1} parent=1 // pred_region
      _
    $region37: #{tpu_custom_call.1} parent=1 // pred_fallthru
      _
    // Predicated region
    $region38: #{tpu_custom_call.1} parent=1 // pred_check
      _
    $region39: #{tpu_custom_call.1} parent=1 // pred_check_branch
      %56 = sbr.rel (0) target = $region41
    $region40: #{tpu_custom_call.1} parent=1 // pred_region
      %57 = dma.done [#allocation4], 4096
    $region41: #{tpu_custom_call.1} parent=1 // pred_fallthru
      _
    // Predicated region
    $region42: #{tpu_custom_call.1} parent=1 // pred_check
      _
    $region43: #{tpu_custom_call.1} parent=1 // pred_check_branch
      %59 = sbr.rel (0) target = $region45
    $region44: #{tpu_custom_call.1} parent=1 // pred_region
      %60 = dma.done [#allocation7], 4096
    $region45: #{tpu_custom_call.1} parent=1 // pred_fallthru
      _
    %v62 = vld [vmem:[%s1] sm:$0xf]
    %v63 = vld [vmem:[%s1 + $0x4] sm:$0xf]
    %v64 = vld [vmem:[%s0] sm:$0xff]
    %v65 = vld [vmem:[%s0 + $0x8] sm:$0xff]
    %v66 = vld [vmem:[%s0 + $0x10] sm:$0xff]
    %v67 = vld [vmem:[%s0 + $0x18] sm:$0xff]
    %v68 = vpack.c.bf16 %v65, %v64
    %v69 = vpack.c.bf16 %v67, %v66
    %v70 = vld [vmem:[%s2] sm:$0x1]
    %v71 = vld [vmem:[#allocation3] sm:$0xff]
    %v72 = vld [vmem:[#allocation3 + $0x8] sm:$0xff]
    %v73 = vld [vmem:[#allocation3 + $0x10] sm:$0xff]
    %v74 = vld [vmem:[#allocation3 + $0x18] sm:$0xff]
    %v75 = vld [vmem:[#allocation3 + $0x20] sm:$0xff]
    %v76 = vld [vmem:[#allocation3 + $0x28] sm:$0xff]
    %v77 = vld [vmem:[#allocation3 + $0x30] sm:$0xff]
    %v78 = vld [vmem:[#allocation3 + $0x38] sm:$0xff]
    %v79 = vld [vmem:[#allocation3 + $0x40] sm:$0xff]
    %v80 = vld [vmem:[#allocation3 + $0x48] sm:$0xff]
    %v81 = vld [vmem:[#allocation3 + $0x50] sm:$0xff]
    %v82 = vld [vmem:[#allocation3 + $0x58] sm:$0xff]
    %v83 = vld [vmem:[#allocation3 + $0x60] sm:$0xff]
    %v84 = vld [vmem:[#allocation3 + $0x68] sm:$0xff]
    %v85 = vld [vmem:[#allocation3 + $0x70] sm:$0xff]
    %v86 = vld [vmem:[#allocation3 + $0x78] sm:$0xff]
    %v87 = vld [vmem:[#allocation3 + $0x80] sm:$0xff]
    %v88 = vld [vmem:[#allocation3 + $0x88] sm:$0xff]
    %v89 = vld [vmem:[#allocation3 + $0x90] sm:$0xff]
    %v90 = vld [vmem:[#allocation3 + $0x98] sm:$0xff]
    %v91 = vld [vmem:[#allocation3 + $0xa0] sm:$0xff]
    %v92 = vld [vmem:[#allocation3 + $0xa8] sm:$0xff]
    %v93 = vld [vmem:[#allocation3 + $0xb0] sm:$0xff]
    %v94 = vld [vmem:[#allocation3 + $0xb8] sm:$0xff]
    %v95 = vld [vmem:[#allocation3 + $0xc0] sm:$0xff]
    %v96 = vld [vmem:[#allocation3 + $0xc8] sm:$0xff]
    %v97 = vld [vmem:[#allocation3 + $0xd0] sm:$0xff]
    %v98 = vld [vmem:[#allocation3 + $0xd8] sm:$0xff]
    %v99 = vld [vmem:[#allocation3 + $0xe0] sm:$0xff]
    %v100 = vld [vmem:[#allocation3 + $0xe8] sm:$0xff]
    %v101 = vld [vmem:[#allocation3 + $0xf0] sm:$0xff]
    %v102 = vld [vmem:[#allocation3 + $0xf8] sm:$0xff]
    %v103 = vld [vmem:[%s4] sm:$0xf]
    %v104 = vld [vmem:[#allocation6] sm:$0xf]
    %v105 = vld [vmem:[#allocation6 + $0x4] sm:$0xf]
    %v106 = vld [vmem:[#allocation6 + $0x8] sm:$0xf]
    %v107 = vld [vmem:[#allocation6 + $0xc] sm:$0xf]
    %v108 = vld [vmem:[#allocation6 + $0x10] sm:$0xf]
    %v109 = vld [vmem:[#allocation6 + $0x14] sm:$0xf]
    %v110 = vld [vmem:[#allocation6 + $0x18] sm:$0xf]
    %v111 = vld [vmem:[#allocation6 + $0x1c] sm:$0xf]
    %v112 = vld [vmem:[#allocation6 + $0x20] sm:$0xf]
    %v113 = vld [vmem:[#allocation6 + $0x24] sm:$0xf]
    %v114 = vld [vmem:[#allocation6 + $0x28] sm:$0xf]
    %v115 = vld [vmem:[#allocation6 + $0x2c] sm:$0xf]
    %v116 = vld [vmem:[#allocation6 + $0x30] sm:$0xf]
    %v117 = vld [vmem:[#allocation6 + $0x34] sm:$0xf]
    %v118 = vld [vmem:[#allocation6 + $0x38] sm:$0xf]
    %v119 = vld [vmem:[#allocation6 + $0x3c] sm:$0xf]
    %v120 = vld [vmem:[#allocation6 + $0x40] sm:$0xf]
    %v121 = vld [vmem:[#allocation6 + $0x44] sm:$0xf]
    %v122 = vld [vmem:[#allocation6 + $0x48] sm:$0xf]
    %v123 = vld [vmem:[#allocation6 + $0x4c] sm:$0xf]
    %v124 = vld [vmem:[#allocation6 + $0x50] sm:$0xf]
    %v125 = vld [vmem:[#allocation6 + $0x54] sm:$0xf]
    %v126 = vld [vmem:[#allocation6 + $0x58] sm:$0xf]
    %v127 = vld [vmem:[#allocation6 + $0x5c] sm:$0xf]
    %v128 = vld [vmem:[#allocation6 + $0x60] sm:$0xf]
    %v129 = vld [vmem:[#allocation6 + $0x64] sm:$0xf]
    %v130 = vld [vmem:[#allocation6 + $0x68] sm:$0xf]
    %v131 = vld [vmem:[#allocation6 + $0x6c] sm:$0xf]
    %v132 = vld [vmem:[#allocation6 + $0x70] sm:$0xf]
    %v133 = vld [vmem:[#allocation6 + $0x74] sm:$0xf]
    %v134 = vld [vmem:[#allocation6 + $0x78] sm:$0xf]
    %v135 = vld [vmem:[#allocation6 + $0x7c] sm:$0xf]
    %v136 = vld [vmem:[#allocation6 + $0x80] sm:$0xf]
    %v137 = vld [vmem:[#allocation6 + $0x84] sm:$0xf]
    %v138 = vld [vmem:[#allocation6 + $0x88] sm:$0xf]
    %v139 = vld [vmem:[#allocation6 + $0x8c] sm:$0xf]
    %v140 = vld [vmem:[#allocation6 + $0x90] sm:$0xf]
    %v141 = vld [vmem:[#allocation6 + $0x94] sm:$0xf]
    %v142 = vld [vmem:[#allocation6 + $0x98] sm:$0xf]
    %v143 = vld [vmem:[#allocation6 + $0x9c] sm:$0xf]
    %v144 = vld [vmem:[#allocation6 + $0xa0] sm:$0xf]
    %v145 = vld [vmem:[#allocation6 + $0xa4] sm:$0xf]
    %v146 = vld [vmem:[#allocation6 + $0xa8] sm:$0xf]
    %v147 = vld [vmem:[#allocation6 + $0xac] sm:$0xf]
    %v148 = vld [vmem:[#allocation6 + $0xb0] sm:$0xf]
    %v149 = vld [vmem:[#allocation6 + $0xb4] sm:$0xf]
    %v150 = vld [vmem:[#allocation6 + $0xb8] sm:$0xf]
    %v151 = vld [vmem:[#allocation6 + $0xbc] sm:$0xf]
    %v152 = vld [vmem:[#allocation6 + $0xc0] sm:$0xf]
    %v153 = vld [vmem:[#allocation6 + $0xc4] sm:$0xf]
    %v154 = vld [vmem:[#allocation6 + $0xc8] sm:$0xf]
    %v155 = vld [vmem:[#allocation6 + $0xcc] sm:$0xf]
    %v156 = vld [vmem:[#allocation6 + $0xd0] sm:$0xf]
    %v157 = vld [vmem:[#allocation6 + $0xd4] sm:$0xf]
    %v158 = vld [vmem:[#allocation6 + $0xd8] sm:$0xf]
    %v159 = vld [vmem:[#allocation6 + $0xdc] sm:$0xf]
    %v160 = vld [vmem:[#allocation6 + $0xe0] sm:$0xf]
    %v161 = vld [vmem:[#allocation6 + $0xe4] sm:$0xf]
    %v162 = vld [vmem:[#allocation6 + $0xe8] sm:$0xf]
    %v163 = vld [vmem:[#allocation6 + $0xec] sm:$0xf]
    %v164 = vld [vmem:[#allocation6 + $0xf0] sm:$0xf]
    %v165 = vld [vmem:[#allocation6 + $0xf4] sm:$0xf]
    %v166 = vld [vmem:[#allocation6 + $0xf8] sm:$0xf]
    %v167 = vld [vmem:[#allocation6 + $0xfc] sm:$0xf]
    %v168 = vld [vmem:[%s6] sm:$0x1]
    %v169 = vld [vmem:[%s7] sm:$0x1]
    %v170 = vld [vmem:[%s8] sm:$0x1]
    %v172 = vlaneseq
    %v173 = vshrl.u32 %v172, 7
    %v174 = vsub.s32 0, %v173
    %v175 = vrot.slane %v70, %v174
    %v179 = vunpack.c.l.b16 %v62
    %v180 = vunpack.c.l.b16 %v63
    %v181 = vpack.c.b16 %v180, %v179
    %vm183 = vcmask 130048
    %v185 = vsel %vm183, %v68, 0
    %v188 = vsel %vm183, %v69, 0
    %190 = vmatprep.subr.bf16.mxu0 0
    %191 = vmatpush1.bf16.msra.mxu0 %v181
    %192 = vmatprep.subr.bf16.mxu0 0
    %193 = vmatpush1.bf16.msra.mxu0 0
    %194 = vmatprep.subr.bf16.mxu0 0
    %195 = vmatpush1.bf16.msra.mxu0 0
    %196 = vmatprep.subr.bf16.mxu0 0
    %197 = vmatpush1.bf16.msra.mxu0 0
    %198 = vmatprep.subr.bf16.mxu0 0
    %199 = vmatpush1.bf16.msra.mxu0 0
    %200 = vmatprep.subr.bf16.mxu0 0
    %201 = vmatpush1.bf16.msra.mxu0 0
    %202 = vmatprep.subr.bf16.mxu0 0
    %203 = vmatpush1.bf16.msra.mxu0 0
    %204 = vmatprep.subr.bf16.mxu0 0
    %205 = vmatpush1.bf16.msra.mxu0 0
    %206 = vmatprep.subr.bf16.mxu0 0
    %207 = vmatpush1.bf16.msra.mxu0 0
    %208 = vmatprep.subr.bf16.mxu0 0
    %209 = vmatpush1.bf16.msra.mxu0 0
    %210 = vmatprep.subr.bf16.mxu0 0
    %211 = vmatpush1.bf16.msra.mxu0 0
    %212 = vmatprep.subr.bf16.mxu0 0
    %213 = vmatpush1.bf16.msra.mxu0 0
    %214 = vmatprep.subr.bf16.mxu0 0
    %215 = vmatpush1.bf16.msra.mxu0 0
    %216 = vmatprep.subr.bf16.mxu0 0
    %217 = vmatpush1.bf16.msra.mxu0 0
    %218 = vmatprep.subr.bf16.mxu0 0
    %219 = vmatpush1.bf16.msra.mxu0 0
    %220 = vmatprep.subr.bf16.mxu0 0
    %221 = vmatpush1.bf16.msra.mxu0 0
    %222 = vmatprep.mubr.bf16.mxu0 0
    %223 = vmatmul.mubr.bf16.gmra.mrb[0].mxu0 %v185
    %v224 = vpop.f32.mrb[0].mxu0
    %v225 = vadd.f32 %v175, %v224
    %v226 = vpop.f32.mrb[0].mxu0
    %v227 = vpop.f32.mrb[0].mxu0
    %v228 = vadd.f32 %v175, %v227
    %v229 = vpop.f32.mrb[0].mxu0
    %230 = vmatprep.mubr.bf16.mxu0 0
    %231 = vmatmul.mubr.bf16.gmra.mrb[0].mxu0 %v188
    %v232 = vpop.f32.mrb[0].mxu0
    %v233 = vadd.f32 %v175, %v232
    %v234 = vpop.f32.mrb[0].mxu0
    %v235 = vpop.f32.mrb[0].mxu0
    %v236 = vadd.f32 %v175, %v235
    %v237 = vpop.f32.mrb[0].mxu0
    %238 = vdwg.mxu0
    %v239 = vmax.f32 %v225, 0.0
    %v240 = vmax.f32 %v228, 0.0
    %v241 = vmax.f32 %v233, 0.0
    %v242 = vmax.f32 %v236, 0.0
    %v243 = vpack.c.bf16 %v240, %v239
    %v244 = vpack.c.bf16 %v242, %v241
    %v246 = vlaneseq
    %v247 = vshrl.u32 %v246, 7
    %v248 = vsub.s32 0, %v247
    %v249 = vrot.slane %v103, %v248
    %v250 = vlaneseq
    %v251 = vshrl.u32 %v250, 7
    %v252 = vsub.s32 1, %v251
    %v253 = vrot.slane %v103, %v252
    %v254 = vlaneseq
    %v255 = vshrl.u32 %v254, 7
    %v256 = vsub.s32 2, %v255
    %v257 = vrot.slane %v103, %v256
    %v258 = vlaneseq
    %v259 = vshrl.u32 %v258, 7
    %v260 = vsub.s32 3, %v259
    %v261 = vrot.slane %v103, %v260
    %v298 = vunpack.c.l.b16 %v71
    %v299 = vunpack.c.h.b16 %v71
    %v300 = vunpack.c.l.b16 %v72
    %v301 = vunpack.c.h.b16 %v72
    %v302 = vunpack.c.l.b16 %v73
    %v303 = vunpack.c.h.b16 %v73
    %v304 = vunpack.c.l.b16 %v74
    %v305 = vunpack.c.h.b16 %v74
    %v306 = vunpack.c.l.b16 %v75
    %v307 = vunpack.c.h.b16 %v75
    %v308 = vunpack.c.l.b16 %v76
    %v309 = vunpack.c.h.b16 %v76
    %v310 = vunpack.c.l.b16 %v77
    %v311 = vunpack.c.h.b16 %v77
    %v312 = vunpack.c.l.b16 %v78
    %v313 = vunpack.c.h.b16 %v78
    %v314 = vunpack.c.l.b16 %v79
    %v315 = vunpack.c.h.b16 %v79
    %v316 = vunpack.c.l.b16 %v80
    %v317 = vunpack.c.h.b16 %v80
    %v318 = vunpack.c.l.b16 %v81
    %v319 = vunpack.c.h.b16 %v81
    %v320 = vunpack.c.l.b16 %v82
    %v321 = vunpack.c.h.b16 %v82
    %v322 = vunpack.c.l.b16 %v83
    %v323 = vunpack.c.h.b16 %v83
    %v324 = vunpack.c.l.b16 %v84
    %v325 = vunpack.c.h.b16 %v84
    %v326 = vunpack.c.l.b16 %v85
    %v327 = vunpack.c.h.b16 %v85
    %v328 = vunpack.c.l.b16 %v86
    %v329 = vunpack.c.h.b16 %v86
    %v330 = vunpack.c.l.b16 %v87
    %v331 = vunpack.c.h.b16 %v87
    %v332 = vunpack.c.l.b16 %v88
    %v333 = vunpack.c.h.b16 %v88
    %v334 = vunpack.c.l.b16 %v89
    %v335 = vunpack.c.h.b16 %v89
    %v336 = vunpack.c.l.b16 %v90
    %v337 = vunpack.c.h.b16 %v90
    %v338 = vunpack.c.l.b16 %v91
    %v339 = vunpack.c.h.b16 %v91
    %v340 = vunpack.c.l.b16 %v92
    %v341 = vunpack.c.h.b16 %v92
    %v342 = vunpack.c.l.b16 %v93
    %v343 = vunpack.c.h.b16 %v93
    %v344 = vunpack.c.l.b16 %v94
    %v345 = vunpack.c.h.b16 %v94
    %v346 = vunpack.c.l.b16 %v95
    %v347 = vunpack.c.h.b16 %v95
    %v348 = vunpack.c.l.b16 %v96
    %v349 = vunpack.c.h.b16 %v96
    %v350 = vunpack.c.l.b16 %v97
    %v351 = vunpack.c.h.b16 %v97
    %v352 = vunpack.c.l.b16 %v98
    %v353 = vunpack.c.h.b16 %v98
    %v354 = vunpack.c.l.b16 %v99
    %v355 = vunpack.c.h.b16 %v99
    %v356 = vunpack.c.l.b16 %v100
    %v357 = vunpack.c.h.b16 %v100
    %v358 = vunpack.c.l.b16 %v101
    %v359 = vunpack.c.h.b16 %v101
    %v360 = vunpack.c.l.b16 %v102
    %v361 = vunpack.c.h.b16 %v102
    %v362 = vpack.c.b16 %v302, %v298
    %v363 = vpack.c.b16 %v303, %v299
    %v364 = vpack.c.b16 %v304, %v300
    %v365 = vpack.c.b16 %v305, %v301
    %v366 = vpack.c.b16 %v310, %v306
    %v367 = vpack.c.b16 %v311, %v307
    %v368 = vpack.c.b16 %v312, %v308
    %v369 = vpack.c.b16 %v313, %v309
    %v370 = vpack.c.b16 %v318, %v314
    %v371 = vpack.c.b16 %v319, %v315
    %v372 = vpack.c.b16 %v320, %v316
    %v373 = vpack.c.b16 %v321, %v317
    %v374 = vpack.c.b16 %v326, %v322
    %v375 = vpack.c.b16 %v327, %v323
    %v376 = vpack.c.b16 %v328, %v324
    %v377 = vpack.c.b16 %v329, %v325
    %v378 = vpack.c.b16 %v334, %v330
    %v379 = vpack.c.b16 %v335, %v331
    %v380 = vpack.c.b16 %v336, %v332
    %v381 = vpack.c.b16 %v337, %v333
    %v382 = vpack.c.b16 %v342, %v338
    %v383 = vpack.c.b16 %v343, %v339
    %v384 = vpack.c.b16 %v344, %v340
    %v385 = vpack.c.b16 %v345, %v341
    %v386 = vpack.c.b16 %v350, %v346
    %v387 = vpack.c.b16 %v351, %v347
    %v388 = vpack.c.b16 %v352, %v348
    %v389 = vpack.c.b16 %v353, %v349
    %v390 = vpack.c.b16 %v358, %v354
    %v391 = vpack.c.b16 %v359, %v355
    %v392 = vpack.c.b16 %v360, %v356
    %v393 = vpack.c.b16 %v361, %v357
    %426 = vmatprep.subr.bf16.mxu0 %v363
    %427 = vmatpush1.bf16.msra.mxu0 %v362
    %428 = vmatprep.subr.bf16.mxu0 %v367
    %429 = vmatpush1.bf16.msra.mxu0 %v366
    %430 = vmatprep.subr.bf16.mxu0 %v371
    %431 = vmatpush1.bf16.msra.mxu0 %v370
    %432 = vmatprep.subr.bf16.mxu0 %v375
    %433 = vmatpush1.bf16.msra.mxu0 %v374
    %434 = vmatprep.subr.bf16.mxu0 %v379
    %435 = vmatpush1.bf16.msra.mxu0 %v378
    %436 = vmatprep.subr.bf16.mxu0 %v383
    %437 = vmatpush1.bf16.msra.mxu0 %v382
    %438 = vmatprep.subr.bf16.mxu0 %v387
    %439 = vmatpush1.bf16.msra.mxu0 %v386
    %440 = vmatprep.subr.bf16.mxu0 %v391
    %441 = vmatpush1.bf16.msra.mxu0 %v390
    %442 = vmatprep.subr.bf16.mxu0 0
    %443 = vmatpush1.bf16.msra.mxu0 0
    %444 = vmatprep.subr.bf16.mxu0 0
    %445 = vmatpush1.bf16.msra.mxu0 0
    %446 = vmatprep.subr.bf16.mxu0 0
    %447 = vmatpush1.bf16.msra.mxu0 0
    %448 = vmatprep.subr.bf16.mxu0 0
    %449 = vmatpush1.bf16.msra.mxu0 0
    %450 = vmatprep.subr.bf16.mxu0 0
    %451 = vmatpush1.bf16.msra.mxu0 0
    %452 = vmatprep.subr.bf16.mxu0 0
    %453 = vmatpush1.bf16.msra.mxu0 0
    %454 = vmatprep.subr.bf16.mxu0 0
    %455 = vmatpush1.bf16.msra.mxu0 0
    %456 = vmatprep.subr.bf16.mxu0 0
    %457 = vmatpush1.bf16.msra.mxu0 0
    %458 = vmatprep.mubr.bf16.mxu0 0
    %459 = vmatmul.mubr.bf16.gmra.mrb[0].mxu0 %v243
    %v460 = vpop.f32.mrb[0].mxu0
    %v461 = vadd.f32 %v249, %v460
    %v462 = vpop.f32.mrb[0].mxu0
    %v463 = vadd.f32 %v253, %v462
    %v464 = vpop.f32.mrb[0].mxu0
    %v465 = vadd.f32 %v249, %v464
    %v466 = vpop.f32.mrb[0].mxu0
    %v467 = vadd.f32 %v253, %v466
    %468 = vmatprep.mubr.bf16.mxu0 0
    %469 = vmatmul.mubr.bf16.gmra.mrb[0].mxu0 %v244
    %v470 = vpop.f32.mrb[0].mxu0
    %v471 = vadd.f32 %v249, %v470
    %v472 = vpop.f32.mrb[0].mxu0
    %v473 = vadd.f32 %v253, %v472
    %v474 = vpop.f32.mrb[0].mxu0
    %v475 = vadd.f32 %v249, %v474
    %v476 = vpop.f32.mrb[0].mxu0
    %v477 = vadd.f32 %v253, %v476
    %478 = vdwg.mxu0
    %479 = vmatprep.subr.bf16.mxu0 %v365
    %480 = vmatpush1.bf16.msra.mxu0 %v364
    %481 = vmatprep.subr.bf16.mxu0 %v369
    %482 = vmatpush1.bf16.msra.mxu0 %v368
    %483 = vmatprep.subr.bf16.mxu0 %v373
    %484 = vmatpush1.bf16.msra.mxu0 %v372
    %485 = vmatprep.subr.bf16.mxu0 %v377
    %486 = vmatpush1.bf16.msra.mxu0 %v376
    %487 = vmatprep.subr.bf16.mxu0 %v381
    %488 = vmatpush1.bf16.msra.mxu0 %v380
    %489 = vmatprep.subr.bf16.mxu0 %v385
    %490 = vmatpush1.bf16.msra.mxu0 %v384
    %491 = vmatprep.subr.bf16.mxu0 %v389
    %492 = vmatpush1.bf16.msra.mxu0 %v388
    %493 = vmatprep.subr.bf16.mxu0 %v393
    %494 = vmatpush1.bf16.msra.mxu0 %v392
    %495 = vmatprep.subr.bf16.mxu0 0
    %496 = vmatpush1.bf16.msra.mxu0 0
    %497 = vmatprep.subr.bf16.mxu0 0
    %498 = vmatpush1.bf16.msra.mxu0 0
    %499 = vmatprep.subr.bf16.mxu0 0
    %500 = vmatpush1.bf16.msra.mxu0 0
    %501 = vmatprep.subr.bf16.mxu0 0
    %502 = vmatpush1.bf16.msra.mxu0 0
    %503 = vmatprep.subr.bf16.mxu0 0
    %504 = vmatpush1.bf16.msra.mxu0 0
    %505 = vmatprep.subr.bf16.mxu0 0
    %506 = vmatpush1.bf16.msra.mxu0 0
    %507 = vmatprep.subr.bf16.mxu0 0
    %508 = vmatpush1.bf16.msra.mxu0 0
    %509 = vmatprep.subr.bf16.mxu0 0
    %510 = vmatpush1.bf16.msra.mxu0 0
    %511 = vmatprep.mubr.bf16.mxu0 0
    %512 = vmatmul.mubr.bf16.gmra.mrb[0].mxu0 %v243
    %v513 = vpop.f32.mrb[0].mxu0
    %v514 = vadd.f32 %v257, %v513
    %v515 = vpop.f32.mrb[0].mxu0
    %v516 = vadd.f32 %v261, %v515
    %v517 = vpop.f32.mrb[0].mxu0
    %v518 = vadd.f32 %v257, %v517
    %v519 = vpop.f32.mrb[0].mxu0
    %v520 = vadd.f32 %v261, %v519
    %521 = vmatprep.mubr.bf16.mxu0 0
    %522 = vmatmul.mubr.bf16.gmra.mrb[0].mxu0 %v244
    %v523 = vpop.f32.mrb[0].mxu0
    %v524 = vadd.f32 %v257, %v523
    %v525 = vpop.f32.mrb[0].mxu0
    %v526 = vadd.f32 %v261, %v525
    %v527 = vpop.f32.mrb[0].mxu0
    %v528 = vadd.f32 %v257, %v527
    %v529 = vpop.f32.mrb[0].mxu0
    %v530 = vadd.f32 %v261, %v529
    %531 = vdwg.mxu0
    %v532 = vmax.f32 %v461, 0.0
    %v533 = vmax.f32 %v463, 0.0
    %v534 = vmax.f32 %v514, 0.0
    %v535 = vmax.f32 %v516, 0.0
    %v536 = vmax.f32 %v465, 0.0
    %v537 = vmax.f32 %v467, 0.0
    %v538 = vmax.f32 %v518, 0.0
    %v539 = vmax.f32 %v520, 0.0
    %v540 = vmax.f32 %v471, 0.0
    %v541 = vmax.f32 %v473, 0.0
    %v542 = vmax.f32 %v524, 0.0
    %v543 = vmax.f32 %v526, 0.0
    %v544 = vmax.f32 %v475, 0.0
    %v545 = vmax.f32 %v477, 0.0
    %v546 = vmax.f32 %v528, 0.0
    %v547 = vmax.f32 %v530, 0.0
    %v548 = vpack.c.bf16 %v536, %v532
    %v549 = vpack.c.bf16 %v537, %v533
    %v550 = vpack.c.bf16 %v538, %v534
    %v551 = vpack.c.bf16 %v539, %v535
    %v552 = vpack.c.bf16 %v544, %v540
    %v553 = vpack.c.bf16 %v545, %v541
    %v554 = vpack.c.bf16 %v546, %v542
    %v555 = vpack.c.bf16 %v547, %v543
    %v557 = vlaneseq
    %v558 = vshrl.u32 %v557, 7
    %v559 = vsub.s32 0, %v558
    %v560 = vrot.slane %v168, %v559
    %v626 = vunpack.c.l.b16 %v104
    %v627 = vunpack.c.l.b16 %v105
    %v628 = vunpack.c.l.b16 %v106
    %v629 = vunpack.c.l.b16 %v107
    %v630 = vunpack.c.l.b16 %v108
    %v631 = vunpack.c.l.b16 %v109
    %v632 = vunpack.c.l.b16 %v110
    %v633 = vunpack.c.l.b16 %v111
    %v634 = vunpack.c.l.b16 %v112
    %v635 = vunpack.c.l.b16 %v113
    %v636 = vunpack.c.l.b16 %v114
    %v637 = vunpack.c.l.b16 %v115
    %v638 = vunpack.c.l.b16 %v116
    %v639 = vunpack.c.l.b16 %v117
    %v640 = vunpack.c.l.b16 %v118
    %v641 = vunpack.c.l.b16 %v119
    %v642 = vunpack.c.l.b16 %v120
    %v643 = vunpack.c.l.b16 %v121
    %v644 = vunpack.c.l.b16 %v122
    %v645 = vunpack.c.l.b16 %v123
    %v646 = vunpack.c.l.b16 %v124
    %v647 = vunpack.c.l.b16 %v125
    %v648 = vunpack.c.l.b16 %v126
    %v649 = vunpack.c.l.b16 %v127
    %v650 = vunpack.c.l.b16 %v128
    %v651 = vunpack.c.l.b16 %v129
    %v652 = vunpack.c.l.b16 %v130
    %v653 = vunpack.c.l.b16 %v131
    %v654 = vunpack.c.l.b16 %v132
    %v655 = vunpack.c.l.b16 %v133
    %v656 = vunpack.c.l.b16 %v134
    %v657 = vunpack.c.l.b16 %v135
    %v658 = vunpack.c.l.b16 %v136
    %v659 = vunpack.c.l.b16 %v137
    %v660 = vunpack.c.l.b16 %v138
    %v661 = vunpack.c.l.b16 %v139
    %v662 = vunpack.c.l.b16 %v140
    %v663 = vunpack.c.l.b16 %v141
    %v664 = vunpack.c.l.b16 %v142
    %v665 = vunpack.c.l.b16 %v143
    %v666 = vunpack.c.l.b16 %v144
    %v667 = vunpack.c.l.b16 %v145
    %v668 = vunpack.c.l.b16 %v146
    %v669 = vunpack.c.l.b16 %v147
    %v670 = vunpack.c.l.b16 %v148
    %v671 = vunpack.c.l.b16 %v149
    %v672 = vunpack.c.l.b16 %v150
    %v673 = vunpack.c.l.b16 %v151
    %v674 = vunpack.c.l.b16 %v152
    %v675 = vunpack.c.l.b16 %v153
    %v676 = vunpack.c.l.b16 %v154
    %v677 = vunpack.c.l.b16 %v155
    %v678 = vunpack.c.l.b16 %v156
    %v679 = vunpack.c.l.b16 %v157
    %v680 = vunpack.c.l.b16 %v158
    %v681 = vunpack.c.l.b16 %v159
    %v682 = vunpack.c.l.b16 %v160
    %v683 = vunpack.c.l.b16 %v161
    %v684 = vunpack.c.l.b16 %v162
    %v685 = vunpack.c.l.b16 %v163
    %v686 = vunpack.c.l.b16 %v164
    %v687 = vunpack.c.l.b16 %v165
    %v688 = vunpack.c.l.b16 %v166
    %v689 = vunpack.c.l.b16 %v167
    %v690 = vpack.c.b16 %v627, %v626
    %v691 = vpack.c.b16 %v629, %v628
    %v692 = vpack.c.b16 %v631, %v630
    %v693 = vpack.c.b16 %v633, %v632
    %v694 = vpack.c.b16 %v635, %v634
    %v695 = vpack.c.b16 %v637, %v636
    %v696 = vpack.c.b16 %v639, %v638
    %v697 = vpack.c.b16 %v641, %v640
    %v698 = vpack.c.b16 %v643, %v642
    %v699 = vpack.c.b16 %v645, %v644
    %v700 = vpack.c.b16 %v647, %v646
    %v701 = vpack.c.b16 %v649, %v648
    %v702 = vpack.c.b16 %v651, %v650
    %v703 = vpack.c.b16 %v653, %v652
    %v704 = vpack.c.b16 %v655, %v654
    %v705 = vpack.c.b16 %v657, %v656
    %v706 = vpack.c.b16 %v659, %v658
    %v707 = vpack.c.b16 %v661, %v660
    %v708 = vpack.c.b16 %v663, %v662
    %v709 = vpack.c.b16 %v665, %v664
    %v710 = vpack.c.b16 %v667, %v666
    %v711 = vpack.c.b16 %v669, %v668
    %v712 = vpack.c.b16 %v671, %v670
    %v713 = vpack.c.b16 %v673, %v672
    %v714 = vpack.c.b16 %v675, %v674
    %v715 = vpack.c.b16 %v677, %v676
    %v716 = vpack.c.b16 %v679, %v678
    %v717 = vpack.c.b16 %v681, %v680
    %v718 = vpack.c.b16 %v683, %v682
    %v719 = vpack.c.b16 %v685, %v684
    %v720 = vpack.c.b16 %v687, %v686
    %v721 = vpack.c.b16 %v689, %v688
    %754 = vmatprep.subr.bf16.mxu0 0
    %755 = vmatpush1.bf16.msra.mxu0 %v690
    %756 = vmatprep.subr.bf16.mxu0 0
    %757 = vmatpush1.bf16.msra.mxu0 %v691
    %758 = vmatprep.subr.bf16.mxu0 0
    %759 = vmatpush1.bf16.msra.mxu0 %v692
    %760 = vmatprep.subr.bf16.mxu0 0
    %761 = vmatpush1.bf16.msra.mxu0 %v693
    %762 = vmatprep.subr.bf16.mxu0 0
    %763 = vmatpush1.bf16.msra.mxu0 %v694
    %764 = vmatprep.subr.bf16.mxu0 0
    %765 = vmatpush1.bf16.msra.mxu0 %v695
    %766 = vmatprep.subr.bf16.mxu0 0
    %767 = vmatpush1.bf16.msra.mxu0 %v696
    %768 = vmatprep.subr.bf16.mxu0 0
    %769 = vmatpush1.bf16.msra.mxu0 %v697
    %770 = vmatprep.subr.bf16.mxu0 0
    %771 = vmatpush1.bf16.msra.mxu0 %v698
    %772 = vmatprep.subr.bf16.mxu0 0
    %773 = vmatpush1.bf16.msra.mxu0 %v699
    %774 = vmatprep.subr.bf16.mxu0 0
    %775 = vmatpush1.bf16.msra.mxu0 %v700
    %776 = vmatprep.subr.bf16.mxu0 0
    %777 = vmatpush1.bf16.msra.mxu0 %v701
    %778 = vmatprep.subr.bf16.mxu0 0
    %779 = vmatpush1.bf16.msra.mxu0 %v702
    %780 = vmatprep.subr.bf16.mxu0 0
    %781 = vmatpush1.bf16.msra.mxu0 %v703
    %782 = vmatprep.subr.bf16.mxu0 0
    %783 = vmatpush1.bf16.msra.mxu0 %v704
    %784 = vmatprep.subr.bf16.mxu0 0
    %785 = vmatpush1.bf16.msra.mxu0 %v705
    %786 = vmatprep.mubr.bf16.mxu0 %v549
    %787 = vmatmul.mubr.bf16.gmra.mrb[0].mxu0 %v548
    %v788 = vpop.f32.mrb[0].mxu0
    %v789 = vadd.f32 %v560, %v788
    %v790 = vpop.f32.mrb[0].mxu0
    %v791 = vpop.f32.mrb[0].mxu0
    %v792 = vadd.f32 %v560, %v791
    %v793 = vpop.f32.mrb[0].mxu0
    %794 = vmatprep.mubr.bf16.mxu0 %v553
    %795 = vmatmul.mubr.bf16.gmra.mrb[0].mxu0 %v552
    %v796 = vpop.f32.mrb[0].mxu0
    %v797 = vadd.f32 %v560, %v796
    %v798 = vpop.f32.mrb[0].mxu0
    %v799 = vpop.f32.mrb[0].mxu0
    %v800 = vadd.f32 %v560, %v799
    %v801 = vpop.f32.mrb[0].mxu0
    %802 = vdwg.mxu0
    %803 = vmatprep.subr.bf16.mxu0 0
    %804 = vmatpush1.bf16.msra.mxu0 %v706
    %805 = vmatprep.subr.bf16.mxu0 0
    %806 = vmatpush1.bf16.msra.mxu0 %v707
    %807 = vmatprep.subr.bf16.mxu0 0
    %808 = vmatpush1.bf16.msra.mxu0 %v708
    %809 = vmatprep.subr.bf16.mxu0 0
    %810 = vmatpush1.bf16.msra.mxu0 %v709
    %811 = vmatprep.subr.bf16.mxu0 0
    %812 = vmatpush1.bf16.msra.mxu0 %v710
    %813 = vmatprep.subr.bf16.mxu0 0
    %814 = vmatpush1.bf16.msra.mxu0 %v711
    %815 = vmatprep.subr.bf16.mxu0 0
    %816 = vmatpush1.bf16.msra.mxu0 %v712
    %817 = vmatprep.subr.bf16.mxu0 0
    %818 = vmatpush1.bf16.msra.mxu0 %v713
    %819 = vmatprep.subr.bf16.mxu0 0
    %820 = vmatpush1.bf16.msra.mxu0 %v714
    %821 = vmatprep.subr.bf16.mxu0 0
    %822 = vmatpush1.bf16.msra.mxu0 %v715
    %823 = vmatprep.subr.bf16.mxu0 0
    %824 = vmatpush1.bf16.msra.mxu0 %v716
    %825 = vmatprep.subr.bf16.mxu0 0
    %826 = vmatpush1.bf16.msra.mxu0 %v717
    %827 = vmatprep.subr.bf16.mxu0 0
    %828 = vmatpush1.bf16.msra.mxu0 %v718
    %829 = vmatprep.subr.bf16.mxu0 0
    %830 = vmatpush1.bf16.msra.mxu0 %v719
    %831 = vmatprep.subr.bf16.mxu0 0
    %832 = vmatpush1.bf16.msra.mxu0 %v720
    %833 = vmatprep.subr.bf16.mxu0 0
    %834 = vmatpush1.bf16.msra.mxu0 %v721
    %835 = vmatprep.mubr.bf16.mxu0 %v551
    %836 = vmatmul.mubr.bf16.gmra.mrb[0].mxu0 %v550
    %v837 = vpop.f32.mrb[0].mxu0
    %v838 = vadd.f32 %v789, %v837
    %v839 = vpop.f32.mrb[0].mxu0
    %v840 = vpop.f32.mrb[0].mxu0
    %v841 = vadd.f32 %v792, %v840
    %v842 = vpop.f32.mrb[0].mxu0
    %843 = vmatprep.mubr.bf16.mxu0 %v555
    %844 = vmatmul.mubr.bf16.gmra.mrb[0].mxu0 %v554
    %v845 = vpop.f32.mrb[0].mxu0
    %v846 = vadd.f32 %v797, %v845
    %v847 = vpop.f32.mrb[0].mxu0
    %v848 = vpop.f32.mrb[0].mxu0
    %v849 = vadd.f32 %v800, %v848
    %v850 = vpop.f32.mrb[0].mxu0
    %851 = vdwg.mxu0
    %v852 = vadd.f32 %v239, %v838
    %v853 = vadd.f32 %v240, %v841
    %v854 = vadd.f32 %v241, %v846
    %v855 = vadd.f32 %v242, %v849
    %856 = vadd.xlane.f32.xlu0 %v852
    %v857 = vpop.xlane.xlu0 %856
    %858 = vadd.xlane.f32.xlu0 %v853
    %v859 = vpop.xlane.xlu0 %858
    %860 = vadd.xlane.f32.xlu0 %v854
    %v861 = vpop.xlane.xlu0 %860
    %862 = vadd.xlane.f32.xlu0 %v855
    %v863 = vpop.xlane.xlu0 %862
    %v864 = vmul.f32 %v857, 0.03125
    %v865 = vmul.f32 %v859, 0.03125
    %v866 = vmul.f32 %v861, 0.03125
    %v867 = vmul.f32 %v863, 0.03125
    %v868 = vsub.f32 %v852, %v864
    %v869 = vsub.f32 %v853, %v865
    %v870 = vsub.f32 %v854, %v866
    %v871 = vsub.f32 %v855, %v867
    %v872 = vlaneseq
    %v873 = vand.u32 %v872, 127
    %vm874 = vcmp.lt.s32.totalorder %v873, 32
    %v875 = vsel %vm874, %v868, 0.0
    %v876 = vsel %vm874, %v869, 0.0
    %v877 = vsel %vm874, %v870, 0.0
    %v878 = vsel %vm874, %v871, 0.0
    %v879 = vmul.f32 %v875, %v875
    %v880 = vmul.f32 %v876, %v876
    %v881 = vmul.f32 %v877, %v877
    %v882 = vmul.f32 %v878, %v878
    %883 = vadd.xlane.f32.xlu0 %v879
    %v884 = vpop.xlane.xlu0 %883
    %885 = vadd.xlane.f32.xlu0 %v880
    %v886 = vpop.xlane.xlu0 %885
    %887 = vadd.xlane.f32.xlu0 %v881
    %v888 = vpop.xlane.xlu0 %887
    %889 = vadd.xlane.f32.xlu0 %v882
    %v890 = vpop.xlane.xlu0 %889
    %v891 = vmul.f32 %v884, 0.03125
    %v892 = vmul.f32 %v886, 0.03125
    %v893 = vmul.f32 %v888, 0.03125
    %v894 = vmul.f32 %v890, 0.03125
    %v895 = vadd.f32 %v891, 1e-05
    %v896 = vadd.f32 %v892, 1e-05
    %v897 = vadd.f32 %v893, 1e-05
    %v898 = vadd.f32 %v894, 1e-05
    %v899 = vrsqrt.pop %v895
    %v900 = vrsqrt.pop %v896
    %v901 = vrsqrt.pop %v897
    %v902 = vrsqrt.pop %v898
    %v903 = vmul.f32 %v875, %v899
    %v904 = vmul.f32 %v876, %v900
    %v905 = vmul.f32 %v877, %v901
    %v906 = vmul.f32 %v878, %v902
    %v908 = vlaneseq
    %v909 = vshrl.u32 %v908, 7
    %v910 = vsub.s32 0, %v909
    %v911 = vrot.slane %v169, %v910
    %v913 = vmul.f32 %v903, %v911
    %v914 = vmul.f32 %v904, %v911
    %v915 = vmul.f32 %v905, %v911
    %v916 = vmul.f32 %v906, %v911
    %v918 = vlaneseq
    %v919 = vshrl.u32 %v918, 7
    %v920 = vsub.s32 0, %v919
    %v921 = vrot.slane %v170, %v920
    %v923 = vadd.f32 %v913, %v921
    %v924 = vadd.f32 %v914, %v921
    %v925 = vadd.f32 %v915, %v921
    %v926 = vadd.f32 %v916, %v921
    %927 = vst [vmem:[#allocation2] sm:$0xff] %v923
    %928 = vst [vmem:[#allocation2 + $0x8] sm:$0xff] %v924
    %929 = vst [vmem:[#allocation2 + $0x10] sm:$0xff] %v925
    %930 = vst [vmem:[#allocation2 + $0x18] sm:$0xff] %v926
    %v931 = vld [vmem:[#allocation2] ss:$4 sm:$0xff]
    %s932 = scalar_lea.vmem [#allocation2], 1
    %v933 = vld [vmem:[%s932] ss:$4 sm:$0xff]
    %934 = vrot.lane.b32.xlu0 %v933, 32
    %v935 = vpop.permute.xlu0 %934
    %v936 = vadd.f32 %v931, %v935
    %s937 = scalar_lea.vmem [#allocation2], 2
    %v938 = vld [vmem:[%s937] ss:$4 sm:$0xff]
    %939 = vrot.lane.b32.xlu0 %v938, 64
    %v940 = vpop.permute.xlu0 %939
    %v941 = vadd.f32 %v936, %v940
    %s942 = scalar_lea.vmem [#allocation2], 3
    %v943 = vld [vmem:[%s942] ss:$4 sm:$0xff]
    %944 = vrot.lane.b32.xlu0 %v943, 96
    %v945 = vpop.permute.xlu0 %944
    %v946 = vadd.f32 %v941, %v945
    %947 = vst [vmem:[#allocation8] sm:$0xff] %v946
    // Predicated region
    $region46: #{tpu_custom_call.1} parent=1 // pred_check
      _
    $region47: #{tpu_custom_call.1} parent=1 // pred_check_branch
      %949 = sbr.rel (0) target = $region49
    $region48: #{tpu_custom_call.1} parent=1 // pred_region
      %s951 = ssub.s32 128, 128
      %952 = vsyncadd [#allocation5], %s951
      %s954 = sshll.u32 [#allocation8], 4
      %s955 = int_to_ptr.vmem [resolvable:$true] %s954
      %957 = dma.vmem_to_hbm [thread:$0]  %s955, 128, %s9, [#allocation5]
    $region49: #{tpu_custom_call.1} parent=1 // pred_fallthru
      _
    // Predicated region
    $region50: #{tpu_custom_call.1} parent=1 // pred_check
      _
    $region51: #{tpu_custom_call.1} parent=1 // pred_check_branch
      %959 = sbr.rel (0) target = $region53
    $region52: #{tpu_custom_call.1} parent=1 // pred_region
      %960 = dma.done [#allocation5], 128
    $region53: #{tpu_custom_call.1} parent=1 // pred_fallthru
      _
    %961 = vsyncpa [#allocation4], 1
    %962 = vsyncpa [#allocation7], 1
    %963 = vsyncpa [#allocation5], 1

</llo_original>
